<compile_context>
chip_gen: v7x
topology: tpu7x:2x2x1
jax: 0.10.0
libtpu: 0.0.40
codegen_flags: <defaults>
</compile_context>

<pallas_src>
import functools

import jax
import jax.numpy as jnp
from jax import lax
from jax.experimental import pallas as pl
from jax.experimental.pallas import tpu as pltpu

EPS = 1e-5

# type-B 3x3 mask: allowed kernel taps (ky, kx) = full row 0, row 1 cols 0,1
_ALLOWED_TAPS = ((0, 0), (0, 1), (0, 2), (1, 0), (1, 1))


# ------------------------------- kernels ------------------------------------ #

def _stage1_kernel(x_ref, w1_ref, y1_ref, tail_ref, st_ref):
    """relu(x) @ w1 ; emit y1 tile, its last pad_top rows (halo tail), BN1 sum/sumsq."""
    i = pl.program_id(0)
    a = jnp.maximum(x_ref[...], 0.0).astype(w1_ref.dtype)
    y = jnp.dot(a, w1_ref[...], preferred_element_type=jnp.float32)      # [TR, h] f32
    y1_ref[...] = y.astype(y1_ref.dtype)
    tail_ref[...] = y[y.shape[0] - tail_ref.shape[0]:, :].astype(tail_ref.dtype)

    @pl.when(i == 0)
    def _():
        st_ref[...] = jnp.zeros_like(st_ref)
    st_ref[...] += jnp.concatenate(
        [jnp.sum(y, axis=0, keepdims=True),
         jnp.sum(y * y, axis=0, keepdims=True)], axis=0)


def _stage2_kernel(y1_ref, tail_ref, s1_ref, t1_ref, wk_ref, y2_ref, st_ref,
                   a1ext_ref, *, H, W):
    """a1 = relu(BN1(y1)); masked type-B 3x3 conv as 5 accumulated dots; BN2 sum/sumsq."""
    i = pl.program_id(0)
    TR, h = y1_ref.shape
    pad_top = tail_ref.shape[0]
    cdt = wk_ref.dtype
    s1 = s1_ref[...]
    t1 = t1_ref[...]

    # Current tile of a1 into the row-extended scratch (halo rows [0, pad_top) on top).
    a1 = jnp.maximum(y1_ref[...].astype(jnp.float32) * s1 + t1, 0.0)     # [TR, h]
    a1ext_ref[pad_top:pad_top + TR, :] = a1

    @pl.when(i == 0)
    def _():
        a1ext_ref[0:pad_top, :] = jnp.zeros((pad_top, h), jnp.float32)

    @pl.when(i > 0)
    def _():
        halo = tail_ref[...].astype(jnp.float32)                         # prev-tile y1 tail
        a1ext_ref[0:pad_top, :] = jnp.maximum(halo * s1 + t1, 0.0)

    # Per-row image-boundary masks at [TR, 1] width (broadcast across lanes).
    g = lax.broadcasted_iota(jnp.int32, (TR, 1), 0) + i * TR             # global row index
    xc = g % W
    yc = (g // W) % H
    m_y = yc >= 1
    m_xl = xc >= 1
    m_xr = xc <= W - 2

    def tap(row_offset, mask):
        slab = a1ext_ref[pad_top + row_offset:pad_top + row_offset + TR, :]
        return jnp.where(mask, slab, 0.0).astype(cdt)

    # (ky,kx)->(dy,dx): (0,0)->(-1,-1) (0,1)->(-1,0) (0,2)->(-1,+1) (1,0)->(0,-1) (1,1)->(0,0)
    y = jnp.dot(tap(-W - 1, jnp.logical_and(m_y, m_xl)), wk_ref[0],
                preferred_element_type=jnp.float32)
    y += jnp.dot(tap(-W, m_y), wk_ref[1], preferred_element_type=jnp.float32)
    y += jnp.dot(tap(-W + 1, jnp.logical_and(m_y, m_xr)), wk_ref[2],
                 preferred_element_type=jnp.float32)
    y += jnp.dot(tap(-1, m_xl), wk_ref[3], preferred_element_type=jnp.float32)
    y += jnp.dot(a1.astype(cdt), wk_ref[4], preferred_element_type=jnp.float32)

    y2_ref[...] = y.astype(y2_ref.dtype)

    @pl.when(i == 0)
    def _():
        st_ref[...] = jnp.zeros_like(st_ref)
    st_ref[...] += jnp.concatenate(
        [jnp.sum(y, axis=0, keepdims=True),
         jnp.sum(y * y, axis=0, keepdims=True)], axis=0)


def _stage3_kernel(y2_ref, s2_ref, t2_ref, w3_ref, y3_ref, st_ref):
    """a2 = relu(BN2(y2)); y3 = a2 @ w3; BN3 sum/sumsq."""
    i = pl.program_id(0)
    a2 = jnp.maximum(y2_ref[...].astype(jnp.float32) * s2_ref[...] + t2_ref[...], 0.0)
    y = jnp.dot(a2.astype(w3_ref.dtype), w3_ref[...],
                preferred_element_type=jnp.float32)                       # [TR, 2h] f32
    y3_ref[...] = y.astype(y3_ref.dtype)

    @pl.when(i == 0)
    def _():
        st_ref[...] = jnp.zeros_like(st_ref)
    st_ref[...] += jnp.concatenate(
        [jnp.sum(y, axis=0, keepdims=True),
         jnp.sum(y * y, axis=0, keepdims=True)], axis=0)


def _stage4_kernel(y3_ref, x_ref, s3_ref, t3_ref, o_ref):
    """out = BN3(y3) + x (residual)."""
    o_ref[...] = (y3_ref[...].astype(jnp.float32) * s3_ref[...] + t3_ref[...]
                  + x_ref[...])


# ------------------------------- helpers ------------------------------------ #

def _bn_fold(stats, gamma, beta, count):
    """Fold per-channel (sum, sumsq) into BN scale/shift: y*s + t."""
    mu = stats[0] / count
    var = stats[1] / count - mu * mu          # one-pass biased variance (training-mode BN)
    s = gamma * lax.rsqrt(var + EPS)
    t = beta - mu * s
    return s.reshape(1, -1), t.reshape(1, -1)


def _pick_tile_rows(R, pad_top, max_tile_rows):
    """Largest TR <= max_tile_rows with TR % 8 == 0, R % TR == 0, TR >= pad_top."""
    best = R
    for tr in range(8, min(R, max_tile_rows) + 1, 8):
        if R % tr == 0 and tr >= pad_top:
            best = tr
    return best


def _cparams(semantics, block_bytes_hint):
    budget = 2 * block_bytes_hint + (4 << 20)          # 2x for double buffering + slack
    return pltpu.CompilerParams(
        dimension_semantics=semantics,
        vmem_limit_bytes=int(min(max(budget, 16 << 20), 64 << 20)))


# -------------------------------- wrapper ------------------------------------ #

def mask_b_conv_block(x_nhwc, params, *, compute_dtype=jnp.bfloat16,
                      max_tile_rows=1024):
    """MaskBConvBlock forward (training-mode BN), NHWC in / NHWC out.

    x_nhwc: [N, H, W, 2h] float32  ->  [N, H, W, 2h] float32
    """
    N, H, W, C2 = x_nhwc.shape
    h = C2 // 2
    R = N * H * W
    cdt = jnp.dtype(compute_dtype)
    cb = cdt.itemsize
    f32 = jnp.float32
    p = params

    pad_top = ((W + 1 + 7) // 8) * 8                   # >= W+1 halo rows, sublane aligned
    TR = _pick_tile_rows(R, pad_top, max_tile_rows)
    nt = R // TR

    x2d = x_nhwc.reshape(R, C2)                        # NHWC flattens with no transpose

    w1 = p["w1"][:, :, 0, 0].T.astype(cdt)                                # [2h, h]
    wk = jnp.stack([p["wm"][:, :, ky, kx].T
                    for (ky, kx) in _ALLOWED_TAPS], axis=0).astype(cdt)   # [5, h, h]
    w3 = p["w3"][:, :, 0, 0].T.astype(cdt)                                # [h, 2h]

    row = lambda c: pl.BlockSpec((TR, c), lambda i: (i, 0))
    tail_w = lambda c: pl.BlockSpec((pad_top, c), lambda i: (i, 0))
    tail_r = lambda c: pl.BlockSpec((pad_top, c), lambda i: (jnp.maximum(i - 1, 0), 0))
    stat = lambda c: pl.BlockSpec((2, c), lambda i: (0, 0))
    full = lambda a: pl.BlockSpec(a.shape, lambda i: (0,) * a.ndim)

    # ---- stage 1: relu -> 1x1 conv down (bias cancels in BN), BN1 stats ----
    y1, y1_tail, st1 = pl.pallas_call(
        _stage1_kernel,
        grid=(nt,),
        in_specs=[row(C2), full(w1)],
        out_specs=(row(h), tail_w(h), stat(h)),
        out_shape=(jax.ShapeDtypeStruct((R, h), cdt),
                   jax.ShapeDtypeStruct((nt * pad_top, h), cdt),
                   jax.ShapeDtypeStruct((2, h), f32)),
        compiler_params=_cparams(("arbitrary",),
                                 TR * C2 * 4 + (TR + pad_top) * h * cb + w1.size * cb),
    )(x2d, w1)
    s1, t1 = _bn_fold(st1, p["g1"], p["be1"], R)

    # ---- stage 2: BN1 -> relu -> masked type-B 3x3 conv, BN2 stats ----
    y2, st2 = pl.pallas_call(
        functools.partial(_stage2_kernel, H=H, W=W),
        grid=(nt,),
        in_specs=[row(h), tail_r(h), full(s1), full(t1), full(wk)],
        out_specs=(row(h), stat(h)),
        out_shape=(jax.ShapeDtypeStruct((R, h), cdt),
                   jax.ShapeDtypeStruct((2, h), f32)),
        scratch_shapes=[pltpu.VMEM((pad_top + TR, h), f32)],
        compiler_params=_cparams(("arbitrary",),
                                 (2 * TR + pad_top) * h * cb + wk.size * cb
                                 + (pad_top + TR) * h * 4),
    )(y1, y1_tail, s1, t1, wk)
    s2, t2 = _bn_fold(st2, p["g2"], p["be2"], R)

    # ---- stage 3: BN2 -> relu -> 1x1 conv up (bias cancels in BN), BN3 stats ----
    y3, st3 = pl.pallas_call(
        _stage3_kernel,
        grid=(nt,),
        in_specs=[row(h), full(s2), full(t2), full(w3)],
        out_specs=(row(C2), stat(C2)),
        out_shape=(jax.ShapeDtypeStruct((R, C2), cdt),
                   jax.ShapeDtypeStruct((2, C2), f32)),
        compiler_params=_cparams(("arbitrary",),
                                 TR * h * cb + TR * C2 * cb + w3.size * cb),
    )(y2, s2, t2, w3)
    s3, t3 = _bn_fold(st3, p["g3"], p["be3"], R)

    # ---- stage 4: BN3 + residual (no cross-tile state -> "parallel" for megacore) ----
    out2d = pl.pallas_call(
        _stage4_kernel,
        grid=(nt,),
        in_specs=[row(C2), row(C2), full(s3), full(t3)],
        out_specs=row(C2),
        out_shape=jax.ShapeDtypeStruct((R, C2), f32),
        compiler_params=_cparams(("parallel",),
                                 TR * C2 * cb + 2 * TR * C2 * 4),
    )(y3, x2d, s3, t3)

    return out2d.reshape(N, H, W, C2)


# --------------------------- pure-JAX reference ----------------------------- #

def reference(x, p):
    """NCHW reference matching the PyTorch module (training-mode BatchNorm)."""
    def bn(y, g, b):
        mu = y.mean(axis=(0, 2, 3), keepdims=True)
        var = ((y - mu) ** 2).mean(axis=(0, 2, 3), keepdims=True)
        return (y - mu) / jnp.sqrt(var + EPS) * g.reshape(1, -1, 1, 1) \
            + b.reshape(1, -1, 1, 1)

    h = p["w1"].shape[0]
    mask = jnp.ones((h, h, 3, 3), jnp.float32)
    mask = mask.at[:, :, 1, 2:].set(0.0)
    mask = mask.at[:, :, 2:, :].set(0.0)

    a = jax.nn.relu(x)
    y = lax.conv_general_dilated(a, p["w1"], (1, 1), "VALID") \
        + p["b1"].reshape(1, -1, 1, 1)
    y = jax.nn.relu(bn(y, p["g1"], p["be1"]))
    y = lax.conv_general_dilated(y, p["wm"] * mask, (1, 1), ((1, 1), (1, 1)))
    y = jax.nn.relu(bn(y, p["g2"], p["be2"]))
    y = lax.conv_general_dilated(y, p["w3"], (1, 1), "VALID") \
        + p["b3"].reshape(1, -1, 1, 1)
    y = bn(y, p["g3"], p["be3"])
    return y + x


def make_params(key, h):
    ks = jax.random.split(key, 12)
    nrm = lambda k, s, sc: sc * jax.random.normal(k, s, jnp.float32)
    return {
        "w1": nrm(ks[0], (h, 2 * h, 1, 1), 0.1),
        "b1": nrm(ks[1], (h,), 0.05),
        "g1": 1.0 + nrm(ks[2], (h,), 0.1),
        "be1": nrm(ks[3], (h,), 0.05),
        "wm": nrm(ks[4], (h, h, 3, 3), 0.1),     # masked type-B 3x3, no bias
        "g2": 1.0 + nrm(ks[5], (h,), 0.1),
        "be2": nrm(ks[6], (h,), 0.05),
        "w3": nrm(ks[7], (2 * h, h, 1, 1), 0.1),
        "b3": nrm(ks[8], (2 * h,), 0.05),
        "g3": 1.0 + nrm(ks[9], (2 * h,), 0.1),
        "be3": nrm(ks[10], (2 * h,), 0.05),
    }


# ---------------------------------- main ------------------------------------ #

if __name__ == "__main__":
    h, N, H, W = 32, 2, 16, 16
    key = jax.random.PRNGKey(0)
    kx, kp = jax.random.split(key)
    x_nchw = jax.random.normal(kx, (N, 2 * h, H, W), jnp.float32)   # PyTorch layout
    params = make_params(kp, h)

    # Kernel-native layout is NHWC; the transposes below exist only to compare against
    # the NCHW PyTorch-style reference (the block itself never transposes).
    x_nhwc = jnp.transpose(x_nchw, (0, 2, 3, 1))
    ref_nhwc = jnp.transpose(reference(x_nchw, params), (0, 2, 3, 1))

    # max_tile_rows=128 -> 4 row tiles: exercises the halo + cross-tile BN stats path.
    out_f32 = mask_b_conv_block(x_nhwc, params, compute_dtype=jnp.float32,
                                max_tile_rows=128)
    out_bf16 = mask_b_conv_block(x_nhwc, params, compute_dtype=jnp.bfloat16,
                                 max_tile_rows=128)
    out_f32, out_bf16, ref_nhwc = jax.block_until_ready((out_f32, out_bf16, ref_nhwc))

    assert out_f32.shape == x_nhwc.shape and out_f32.dtype == jnp.float32
    err32 = float(jnp.max(jnp.abs(out_f32 - ref_nhwc)))
    errbf = float(jnp.max(jnp.abs(out_bf16 - ref_nhwc)))
    assert err32 < 1e-3, f"f32 path max err {err32}"
    assert errbf < 2e-1, f"bf16 path max err {errbf}"   # bf16 matmul rounding budget
    print("KERNEL_OK")
</pallas_src>

<mosaic_0001>
module attributes {stable_mosaic.version = 11 : i64} {
  func.func @_stage1_kernel(%arg0: i32, %arg1: memref<128x64xf32, #tpu.memory_space<vmem>>, %arg2: memref<64x32xf32, #tpu.memory_space<vmem>>, %arg3: memref<128x32xf32, #tpu.memory_space<vmem>>, %arg4: memref<24x32xf32, #tpu.memory_space<vmem>>, %arg5: memref<2x32xf32, #tpu.memory_space<vmem>>) attributes {dimension_semantics = [#tpu.dimension_semantics<arbitrary>], iteration_bounds = array<i64: 4>, scalar_prefetch = 0 : i64, scratch_operands = 0 : i64, tpu.core_type = #tpu.core_type<tc>, window_params = [{transform_indices = @transform_0, window_bounds = array<i64: 128, 64>}, {pipeline_mode = #tpu.pipeline_mode<synchronous>, transform_indices = @transform_1, window_bounds = array<i64: 64, 32>}, {transform_indices = @transform_2, window_bounds = array<i64: 128, 32>}, {transform_indices = @transform_3, window_bounds = array<i64: 24, 32>}, {pipeline_mode = #tpu.pipeline_mode<synchronous>, transform_indices = @transform_4, window_bounds = array<i64: 2, 32>}]} {
    %c0 = arith.constant 0 : index
    %c0_0 = arith.constant 0 : index
    %0 = vector.load %arg1[%c0, %c0_0] : memref<128x64xf32, #tpu.memory_space<vmem>>, vector<128x64xf32>
    %cst = arith.constant 0.000000e+00 : f32
    %1 = vector.broadcast %cst : f32 to vector<128x64xf32>
    %2 = arith.maximumf %0, %1 : vector<128x64xf32>
    %c0_1 = arith.constant 0 : index
    %c0_2 = arith.constant 0 : index
    %3 = vector.load %arg2[%c0_1, %c0_2] : memref<64x32xf32, #tpu.memory_space<vmem>>, vector<64x32xf32>
    %cst_3 = arith.constant dense<0.000000e+00> : vector<128x32xf32>
    %4 = tpu.matmul %2, %3, %cst_3 {dimension_numbers = #tpu.dot_dimension_numbers<[1], [0], [0], [1], [0, 0, 1, 1], [], []>} : vector<128x64xf32>, vector<64x32xf32>, vector<128x32xf32> -> vector<128x32xf32>
    %c0_4 = arith.constant 0 : index
    %c0_5 = arith.constant 0 : index
    %5 = vector.load %arg3[%c0_4, %c0_5] : memref<128x32xf32, #tpu.memory_space<vmem>>, vector<128x32xf32>
    tpu.vector_store %arg3[%c0_4, %c0_5], %4 {strides = array<i32>} : memref<128x32xf32, #tpu.memory_space<vmem>>, vector<128x32xf32>,
    %6 = vector.extract_strided_slice %4 {offsets = [104, 0], sizes = [24, 32], strides = [1, 1]} : vector<128x32xf32> to vector<24x32xf32>
    %c0_6 = arith.constant 0 : index
    %c0_7 = arith.constant 0 : index
    %7 = vector.load %arg4[%c0_6, %c0_7] : memref<24x32xf32, #tpu.memory_space<vmem>>, vector<24x32xf32>
    tpu.vector_store %arg4[%c0_6, %c0_7], %6 {strides = array<i32>} : memref<24x32xf32, #tpu.memory_space<vmem>>, vector<24x32xf32>,
    %c0_i32 = arith.constant 0 : i32
    %8 = arith.cmpi eq, %arg0, %c0_i32 : i32
    %9 = arith.extui %8 : i1 to i32
    %c0_i32_8 = arith.constant 0 : i32
    %10 = arith.cmpi ne, %9, %c0_i32_8 : i32
    scf.if %10 {
      %cst_15 = arith.constant 0.000000e+00 : f32
      %20 = vector.broadcast %cst_15 : f32 to vector<2x32xf32>
      %c0_16 = arith.constant 0 : index
      %c0_17 = arith.constant 0 : index
      %21 = vector.load %arg5[%c0_16, %c0_17] : memref<2x32xf32, #tpu.memory_space<vmem>>, vector<2x32xf32>
      tpu.vector_store %arg5[%c0_16, %c0_17], %20 {strides = array<i32>} : memref<2x32xf32, #tpu.memory_space<vmem>>, vector<2x32xf32>,
    } else {
    }
    %c0_9 = arith.constant 0 : index
    %c0_10 = arith.constant 0 : index
    %11 = vector.load %arg5[%c0_9, %c0_10] : memref<2x32xf32, #tpu.memory_space<vmem>>, vector<2x32xf32>
    %cst_11 = arith.constant dense<0.000000e+00> : vector<32xf32>
    %12 = vector.multi_reduction <add>, %4, %cst_11 [0] : vector<128x32xf32> to vector<32xf32>
    %13 = vector.shape_cast %12 : vector<32xf32> to vector<1x32xf32>
    %14 = arith.mulf %4, %4 : vector<128x32xf32>
    %cst_12 = arith.constant dense<0.000000e+00> : vector<32xf32>
    %15 = vector.multi_reduction <add>, %14, %cst_12 [0] : vector<128x32xf32> to vector<32xf32>
    %16 = vector.shape_cast %15 : vector<32xf32> to vector<1x32xf32>
    %17 = tpu.concatenate %13, %16 in 0 : vector<1x32xf32>, vector<1x32xf32> -> vector<2x32xf32>
    %18 = arith.addf %11, %17 : vector<2x32xf32>
    %c0_13 = arith.constant 0 : index
    %c0_14 = arith.constant 0 : index
    %19 = vector.load %arg5[%c0_13, %c0_14] : memref<2x32xf32, #tpu.memory_space<vmem>>, vector<2x32xf32>
    tpu.vector_store %arg5[%c0_13, %c0_14], %18 {strides = array<i32>} : memref<2x32xf32, #tpu.memory_space<vmem>>, vector<2x32xf32>,
    return
  }
  func.func @transform_0(%arg0: i32) -> (i32, i32) {
    %c0_i32 = arith.constant 0 : i32
    %c0_i32_0 = arith.constant 0 : i32
    return %arg0, %c0_i32 : i32, i32
  }
  func.func @transform_1(%arg0: i32) -> (i32, i32) {
    %c0_i32 = arith.constant 0 : i32
    %c0_i32_0 = arith.constant 0 : i32
    %c0_i32_1 = arith.constant 0 : i32
    return %c0_i32, %c0_i32_0 : i32, i32
  }
  func.func @transform_2(%arg0: i32) -> (i32, i32) {
    %c0_i32 = arith.constant 0 : i32
    %c0_i32_0 = arith.constant 0 : i32
    return %arg0, %c0_i32 : i32, i32
  }
  func.func @transform_3(%arg0: i32) -> (i32, i32) {
    %c0_i32 = arith.constant 0 : i32
    %c0_i32_0 = arith.constant 0 : i32
    return %arg0, %c0_i32 : i32, i32
  }
  func.func @transform_4(%arg0: i32) -> (i32, i32) {
    %c0_i32 = arith.constant 0 : i32
    %c0_i32_0 = arith.constant 0 : i32
    %c0_i32_1 = arith.constant 0 : i32
    return %c0_i32, %c0_i32_0 : i32, i32
  }
}

</mosaic_0001>

<llo_original>
// kernel: tpu_custom_call.1
$region0: #{tpu_custom_call.1}
  #allocation0 [shape = 'u32[]', space=smem, size = 0x4, offset = 0x4, fixed_abs, tag = 'smem constant byte address 0x4 - core index']
  #allocation1 [shape = 'u32[144,128]{1,0:T(1,128)}', space=vmem, size = 0x12000, scoped, tag = 'internal scratch']
  %s0 = inlined_call_operand.vmem [shape: f32[512,64], index: 0, kind: input, shape index: {}]
  %s1 = inlined_call_operand.vmem [shape: f32[64,32], index: 1, kind: input, shape index: {}]
  %s2 = inlined_call_operand.vmem [shape: f32[512,32], index: 2, kind: output, shape index: {0}]
  %s3 = inlined_call_operand.vmem [shape: f32[96,32], index: 3, kind: output, shape index: {1}]
  %s4 = inlined_call_operand.hbm [shape: f32[2,32], index: 4, kind: output, shape index: {2}]
  %5 = xla_tuple %s2, %s3, %s4
  %s6 = sld [smem:[#allocation0]]
  $region61: #{tpu_custom_call.1} parent=0
    _
  %s8 = ssub.s32 1, %s6
  %s9 = scalar_select 0, %s8, %s6
  $region1: #{tpu_custom_call.1} parent=0
    #allocation2 [shape = 'u8[1024]{0}', space=vmem, size = 0x400, scoped, tag = 'output window, operand 2, single buffered']
    #allocation3 [shape = 's32[2]{0}', space=sflag, size = 0x8, scoped, tag = 'scoped memory for tpu_custom_call.1']
    %10 = vsyncpa [#allocation3], 0
    loop: start=0, step=1, limit=6
    $region2: #{tpu_custom_call.1} parent=1 // loop_pre_header
      _
    $region3: #{tpu_custom_call.1} parent=1 // loop_header
      %s12 = sphi 0, %s16
      %p13 = scmp.ge.s32.totalorder %s12, 6
      %s22 = sphi 0, %s24
      %s25 = sphi 0, %s22
      %s26 = sphi 0, %s25
      %s42 = sphi 0, %s26
      %s46 = sphi 0, %s46
      %s48 = sphi 0, %s46
      %s49 = sphi 0, %s48
      %s63 = sphi 0, %s49
      %s69 = sphi 0, %s71
      %s72 = sphi 0, %s69
      %s73 = sphi 0, %s72
      %s89 = sphi 0, %s73
      %s95 = sphi 0, %s97
      %s98 = sphi 0, %s95
      %s99 = sphi 0, %s98
      %s115 = sphi 0, %s99
      %s119 = sphi 0, %s119
      %s121 = sphi 0, %s119
      %s122 = sphi 0, %s121
      %s136 = sphi 0, %s122
    $region4: #{tpu_custom_call.1} parent=1 // loop_header_branch
      %15 = sbr.rel (%p13) target = $region8
    $region5: #{tpu_custom_call.1} parent=1 // loop_body
      %s17 = ssub.s32 %s12, 1
      %s18 = ssub.s32 %s12, 2
      %s19 = sadd.s32 %s12, 1
      %s20 = ssub.s32 %s12, %s19
      %p21 = scmp.eq.s32.totalorder %s20, 0
      %s23 = sadd.s32 %s22, 1
      %s24 = scalar_select %p21, %s22, %s23
      %p27 = pneg %p21
      %p28 = scmp.eq.s32.totalorder %s12, 3
      %p29 = por %p27, %p28
      %p30 = scmp.ne.s32.totalorder %s22, %s25
      %p31 = scmp.eq.s32.totalorder %s12, 0
      %p32 = por %p30, %p31
      %p33 = scmp.ne.s32.totalorder %s22, %s25
      %p34 = scmp.eq.s32.totalorder %s17, 3
      %p35 = por %p33, %p34
      %p36 = scmp.ne.s32.totalorder %s25, %s26
      %p37 = scmp.eq.s32.totalorder %s17, 0
      %p38 = por %p36, %p37
      %p39 = scmp.ne.s32.totalorder %s25, %s26
      %p40 = scmp.eq.s32.totalorder %s18, 3
      %p41 = por %p39, %p40
      %p43 = scmp.ne.s32.totalorder %s26, %s42
      %p44 = scmp.eq.s32.totalorder %s18, 0
      %p45 = por %p43, %p44
      %s47 = sadd.s32 %s46, 1
      %p50 = scmp.eq.s32.totalorder %s12, 3
      %p51 = scmp.ne.s32.totalorder %s46, %s48
      %p52 = scmp.eq.s32.totalorder %s12, 0
      %p53 = por %p51, %p52
      %p54 = scmp.ne.s32.totalorder %s46, %s48
      %p55 = scmp.eq.s32.totalorder %s17, 3
      %p56 = por %p54, %p55
      %p57 = scmp.ne.s32.totalorder %s48, %s49
      %p58 = scmp.eq.s32.totalorder %s17, 0
      %p59 = por %p57, %p58
      %p60 = scmp.ne.s32.totalorder %s48, %s49
      %p61 = scmp.eq.s32.totalorder %s18, 3
      %p62 = por %p60, %p61
      %p64 = scmp.ne.s32.totalorder %s49, %s63
      %p65 = scmp.eq.s32.totalorder %s18, 0
      %p66 = por %p64, %p65
      %s67 = ssub.s32 %s12, %s19
      %p68 = scmp.eq.s32.totalorder %s67, 0
      %s70 = sadd.s32 %s69, 1
      %s71 = scalar_select %p68, %s69, %s70
      %p74 = pneg %p68
      %p75 = scmp.eq.s32.totalorder %s12, 3
      %p76 = por %p74, %p75
      %p77 = scmp.ne.s32.totalorder %s69, %s72
      %p78 = scmp.eq.s32.totalorder %s12, 0
      %p79 = por %p77, %p78
      %p80 = scmp.ne.s32.totalorder %s69, %s72
      %p81 = scmp.eq.s32.totalorder %s17, 3
      %p82 = por %p80, %p81
      %p83 = scmp.ne.s32.totalorder %s72, %s73
      %p84 = scmp.eq.s32.totalorder %s17, 0
      %p85 = por %p83, %p84
      %p86 = scmp.ne.s32.totalorder %s72, %s73
      %p87 = scmp.eq.s32.totalorder %s18, 3
      %p88 = por %p86, %p87
      %p90 = scmp.ne.s32.totalorder %s73, %s89
      %p91 = scmp.eq.s32.totalorder %s18, 0
      %p92 = por %p90, %p91
      %s93 = ssub.s32 %s12, %s19
      %p94 = scmp.eq.s32.totalorder %s93, 0
      %s96 = sadd.s32 %s95, 1
      %s97 = scalar_select %p94, %s95, %s96
      %p100 = pneg %p94
      %p101 = scmp.eq.s32.totalorder %s12, 3
      %p102 = por %p100, %p101
      %p103 = scmp.ne.s32.totalorder %s95, %s98
      %p104 = scmp.eq.s32.totalorder %s12, 0
      %p105 = por %p103, %p104
      %p106 = scmp.ne.s32.totalorder %s95, %s98
      %p107 = scmp.eq.s32.totalorder %s17, 3
      %p108 = por %p106, %p107
      %p109 = scmp.ne.s32.totalorder %s98, %s99
      %p110 = scmp.eq.s32.totalorder %s17, 0
      %p111 = por %p109, %p110
      %p112 = scmp.ne.s32.totalorder %s98, %s99
      %p113 = scmp.eq.s32.totalorder %s18, 3
      %p114 = por %p112, %p113
      %p116 = scmp.ne.s32.totalorder %s99, %s115
      %p117 = scmp.eq.s32.totalorder %s18, 0
      %p118 = por %p116, %p117
      %s120 = sadd.s32 %s119, 1
      %p123 = scmp.eq.s32.totalorder %s12, 3
      %p124 = scmp.ne.s32.totalorder %s119, %s121
      %p125 = scmp.eq.s32.totalorder %s12, 0
      %p126 = por %p124, %p125
      %p127 = scmp.ne.s32.totalorder %s119, %s121
      %p128 = scmp.eq.s32.totalorder %s17, 3
      %p129 = por %p127, %p128
      %p130 = scmp.ne.s32.totalorder %s121, %s122
      %p131 = scmp.eq.s32.totalorder %s17, 0
      %p132 = por %p130, %p131
      %p133 = scmp.ne.s32.totalorder %s121, %s122
      %p134 = scmp.eq.s32.totalorder %s18, 3
      %p135 = por %p133, %p134
      %p137 = scmp.ne.s32.totalorder %s122, %s136
      %p138 = scmp.eq.s32.totalorder %s18, 0
      %p139 = por %p137, %p138
      %p140 = scmp.le.s32.totalorder 1, %s12
      %p141 = scmp.lt.s32.totalorder %s12, 5
      %p142 = pnand %p140, %p141
      %p143 = pneg %p142
      // Predicated region
      $region9: #{tpu_custom_call.1} parent=5 // pred_check
        _
      $region10: #{tpu_custom_call.1} parent=5 // pred_check_branch
        %145 = sbr.rel (%p142) target = $region12
      $region11: #{tpu_custom_call.1} parent=5 // pred_region
        %s146 = ssub.s32 %s12, 1
        // Predicated region
        $region13: #{tpu_custom_call.1} parent=11 // pred_check
          %p147 = pneg %p59
        $region14: #{tpu_custom_call.1} parent=11 // pred_check_branch
          %149 = sbr.rel (%p147) target = $region16
        $region15: #{tpu_custom_call.1} parent=11 // pred_region
          _
        $region16: #{tpu_custom_call.1} parent=11 // pred_fallthru
          _
      $region12: #{tpu_custom_call.1} parent=5 // pred_fallthru
        _
      %p150 = scmp.lt.s32.totalorder %s12, 4
      // Predicated region
      $region17: #{tpu_custom_call.1} parent=5 // pred_check
        %p151 = pneg %p150
      $region18: #{tpu_custom_call.1} parent=5 // pred_check_branch
        %153 = sbr.rel (%p151) target = $region20
      $region19: #{tpu_custom_call.1} parent=5 // pred_region
        // Predicated region
        $region21: #{tpu_custom_call.1} parent=19 // pred_check
          %p154 = pneg %p32
        $region22: #{tpu_custom_call.1} parent=19 // pred_check_branch
          %156 = sbr.rel (%p154) target = $region24
        $region23: #{tpu_custom_call.1} parent=19 // pred_region
          %s157 = smul.u32 16, %s12
          %p158 = scmp.lt.s32.totalorder %s157, 63
          %s159 = scalar_select %p158, %s157, 63
          %s160 = smul.addr %s159, 8
          %s161 = scalar_lea.vmem %s0, %s160
          %s162 = smul.u32 16, %s12
        $region24: #{tpu_custom_call.1} parent=19 // pred_fallthru
          _
      $region20: #{tpu_custom_call.1} parent=5 // pred_fallthru
        _
      %p163 = scmp.le.s32.totalorder 1, %s12
      %p164 = scmp.lt.s32.totalorder %s12, 5
      %p165 = pnand %p163, %p164
      %p166 = pneg %p165
      // Predicated region
      $region25: #{tpu_custom_call.1} parent=5 // pred_check
        _
      $region26: #{tpu_custom_call.1} parent=5 // pred_check_branch
        %168 = sbr.rel (%p165) target = $region28
      $region27: #{tpu_custom_call.1} parent=5 // pred_region
        %s169 = ssub.s32 %s12, 1
        %s170 = smul.u32 16, %s17
        %p171 = scmp.lt.s32.totalorder %s170, 63
        %s172 = scalar_select %p171, %s170, 63
        %s173 = smul.addr %s172, 8
        %s174 = scalar_lea.vmem %s0, %s173
        %p175 = pneg %p38
        %p176 = pneg %p35
        %p177 = pneg %p59
        %p178 = pneg %p56
        %p179 = pneg %p85
        %p180 = pneg %p82
        %s181 = smul.u32 16, %s17
        %p182 = scmp.lt.s32.totalorder %s181, 63
        %s183 = scalar_select %p182, %s181, 63
        %s184 = smul.addr %s183, 8
        %s185 = scalar_lea.vmem %s2, %s184
        %p186 = pneg %p111
        %p187 = pneg %p108
        %s188 = smul.u32 3, %s17
        %p189 = scmp.lt.s32.totalorder %s188, 11
        %s190 = scalar_select %p189, %s188, 11
        %s191 = smul.addr %s190, 8
        %s192 = scalar_lea.vmem %s3, %s191
        %p193 = pneg %p132
        %p194 = pneg %p129
        %s195 = smul.u32 16, %s17
        %p196 = scmp.lt.s32.totalorder %s195, 63
        %s197 = scalar_select %p196, %s195, 63
        %s198 = smul.addr %s197, 8
        %s199 = scalar_lea.vmem %s0, %s198
        %s200 = smul.u32 16, %s17
        %s201 = smul.u32 16, %s17
        %p202 = scmp.lt.s32.totalorder %s201, 63
        %s203 = scalar_select %p202, %s201, 63
        %s204 = smul.addr %s203, 8
        %s205 = scalar_lea.vmem %s2, %s204
        %s206 = smul.u32 16, %s17
        %s207 = smul.u32 3, %s17
        %p208 = scmp.lt.s32.totalorder %s207, 11
        %s209 = scalar_select %p208, %s207, 11
        %s210 = smul.addr %s209, 8
        %s211 = scalar_lea.vmem %s3, %s210
        %s212 = smul.u32 3, %s17
        %v213 = vld [vmem:[%s199] sm:$0xff]
        %v214 = vld [vmem:[%s199 + $0x8] sm:$0xff]
        %v215 = vld [vmem:[%s199 + $0x10] sm:$0xff]
        %v216 = vld [vmem:[%s199 + $0x18] sm:$0xff]
        %v217 = vld [vmem:[%s199 + $0x20] sm:$0xff]
        %v218 = vld [vmem:[%s199 + $0x28] sm:$0xff]
        %v219 = vld [vmem:[%s199 + $0x30] sm:$0xff]
        %v220 = vld [vmem:[%s199 + $0x38] sm:$0xff]
        %v221 = vld [vmem:[%s199 + $0x40] sm:$0xff]
        %v222 = vld [vmem:[%s199 + $0x48] sm:$0xff]
        %v223 = vld [vmem:[%s199 + $0x50] sm:$0xff]
        %v224 = vld [vmem:[%s199 + $0x58] sm:$0xff]
        %v225 = vld [vmem:[%s199 + $0x60] sm:$0xff]
        %v226 = vld [vmem:[%s199 + $0x68] sm:$0xff]
        %v227 = vld [vmem:[%s199 + $0x70] sm:$0xff]
        %v228 = vld [vmem:[%s199 + $0x78] sm:$0xff]
        %v229 = vmax.f32 %v213, 0.0
        %v230 = vmax.f32 %v214, 0.0
        %v231 = vmax.f32 %v215, 0.0
        %v232 = vmax.f32 %v216, 0.0
        %v233 = vmax.f32 %v217, 0.0
        %v234 = vmax.f32 %v218, 0.0
        %v235 = vmax.f32 %v219, 0.0
        %v236 = vmax.f32 %v220, 0.0
        %v237 = vmax.f32 %v221, 0.0
        %v238 = vmax.f32 %v222, 0.0
        %v239 = vmax.f32 %v223, 0.0
        %v240 = vmax.f32 %v224, 0.0
        %v241 = vmax.f32 %v225, 0.0
        %v242 = vmax.f32 %v226, 0.0
        %v243 = vmax.f32 %v227, 0.0
        %v244 = vmax.f32 %v228, 0.0
        %v245 = vld [vmem:[%s1] sm:$0xff]
        %v246 = vld [vmem:[%s1 + $0x8] sm:$0xff]
        %v247 = vld [vmem:[%s1 + $0x10] sm:$0xff]
        %v248 = vld [vmem:[%s1 + $0x18] sm:$0xff]
        %v249 = vld [vmem:[%s1 + $0x20] sm:$0xff]
        %v250 = vld [vmem:[%s1 + $0x28] sm:$0xff]
        %v251 = vld [vmem:[%s1 + $0x30] sm:$0xff]
        %v252 = vld [vmem:[%s1 + $0x38] sm:$0xff]
        %vm253 = vcmask 523264
        %v255 = vsel %vm253, %v229, 0
        %v258 = vsel %vm253, %v230, 0
        %v261 = vsel %vm253, %v231, 0
        %v264 = vsel %vm253, %v232, 0
        %v267 = vsel %vm253, %v233, 0
        %v270 = vsel %vm253, %v234, 0
        %v273 = vsel %vm253, %v235, 0
        %v276 = vsel %vm253, %v236, 0
        %v279 = vsel %vm253, %v237, 0
        %v282 = vsel %vm253, %v238, 0
        %v285 = vsel %vm253, %v239, 0
        %v288 = vsel %vm253, %v240, 0
        %v291 = vsel %vm253, %v241, 0
        %v294 = vsel %vm253, %v242, 0
        %v297 = vsel %vm253, %v243, 0
        %v300 = vsel %vm253, %v244, 0
        %302 = vmatprep.subr.mxu0 0.0
        %303 = vmatpush1.msra.mxu0 %v245
        %304 = vmatprep.subr.mxu0 0.0
        %305 = vmatpush1.msra.mxu0 %v246
        %306 = vmatprep.subr.mxu0 0.0
        %307 = vmatpush1.msra.mxu0 %v247
        %308 = vmatprep.subr.mxu0 0.0
        %309 = vmatpush1.msra.mxu0 %v248
        %310 = vmatprep.subr.mxu0 0.0
        %311 = vmatpush1.msra.mxu0 %v249
        %312 = vmatprep.subr.mxu0 0.0
        %313 = vmatpush1.msra.mxu0 %v250
        %314 = vmatprep.subr.mxu0 0.0
        %315 = vmatpush1.msra.mxu0 %v251
        %316 = vmatprep.subr.mxu0 0.0
        %317 = vmatpush1.msra.mxu0 %v252
        %318 = vmatprep.subr.mxu0 0.0
        %319 = vmatpush1.msra.mxu0 0.0
        %320 = vmatprep.subr.mxu0 0.0
        %321 = vmatpush1.msra.mxu0 0.0
        %322 = vmatprep.subr.mxu0 0.0
        %323 = vmatpush1.msra.mxu0 0.0
        %324 = vmatprep.subr.mxu0 0.0
        %325 = vmatpush1.msra.mxu0 0.0
        %326 = vmatprep.subr.mxu0 0.0
        %327 = vmatpush1.msra.mxu0 0.0
        %328 = vmatprep.subr.mxu0 0.0
        %329 = vmatpush1.msra.mxu0 0.0
        %330 = vmatprep.subr.mxu0 0.0
        %331 = vmatpush1.msra.mxu0 0.0
        %332 = vmatprep.subr.mxu0 0.0
        %333 = vmatpush1.msra.mxu0 0.0
        %334 = vmatprep.subr.mxu0 0.0
        %335 = vmatpush1.msra.mxu0 0.0
        %336 = vmatprep.subr.mxu0 0.0
        %337 = vmatpush1.msra.mxu0 0.0
        %338 = vmatprep.subr.mxu0 0.0
        %339 = vmatpush1.msra.mxu0 0.0
        %340 = vmatprep.subr.mxu0 0.0
        %341 = vmatpush1.msra.mxu0 0.0
        %342 = vmatprep.subr.mxu0 0.0
        %343 = vmatpush1.msra.mxu0 0.0
        %344 = vmatprep.subr.mxu0 0.0
        %345 = vmatpush1.msra.mxu0 0.0
        %346 = vmatprep.subr.mxu0 0.0
        %347 = vmatpush1.msra.mxu0 0.0
        %348 = vmatprep.subr.mxu0 0.0
        %349 = vmatpush1.msra.mxu0 0.0
        %350 = vmatprep.subr.mxu0 0.0
        %351 = vmatpush1.msra.mxu0 0.0
        %352 = vmatprep.subr.mxu0 0.0
        %353 = vmatpush1.msra.mxu0 0.0
        %354 = vmatprep.subr.mxu0 0.0
        %355 = vmatpush1.msra.mxu0 0.0
        %356 = vmatprep.subr.mxu0 0.0
        %357 = vmatpush1.msra.mxu0 0.0
        %358 = vmatprep.subr.mxu0 0.0
        %359 = vmatpush1.msra.mxu0 0.0
        %360 = vmatprep.subr.mxu0 0.0
        %361 = vmatpush1.msra.mxu0 0.0
        %362 = vmatprep.subr.mxu0 0.0
        %363 = vmatpush1.msra.mxu0 0.0
        %364 = vmatprep.subr.mxu0 0.0
        %365 = vmatpush1.msra.mxu0 0.0
        %366 = vmatprep.mubr.f32.mxu0 0.0
        %367 = vmatmul.mubr.f32.gmra.mrb[0].mxu0 %v255
        %v368 = vpop.f32.mrb[0].mxu0
        %v369 = vadd.f32 0.0, %v368
        %v370 = vpop.f32.mrb[0].mxu0
        %371 = vmatprep.mubr.f32.mxu0 0.0
        %372 = vmatmul.mubr.f32.gmra.mrb[0].mxu0 %v258
        %v373 = vpop.f32.mrb[0].mxu0
        %v374 = vadd.f32 0.0, %v373
        %v375 = vpop.f32.mrb[0].mxu0
        %376 = vmatprep.mubr.f32.mxu0 0.0
        %377 = vmatmul.mubr.f32.gmra.mrb[0].mxu0 %v261
        %v378 = vpop.f32.mrb[0].mxu0
        %v379 = vadd.f32 0.0, %v378
        %v380 = vpop.f32.mrb[0].mxu0
        %381 = vmatprep.mubr.f32.mxu0 0.0
        %382 = vmatmul.mubr.f32.gmra.mrb[0].mxu0 %v264
        %v383 = vpop.f32.mrb[0].mxu0
        %v384 = vadd.f32 0.0, %v383
        %v385 = vpop.f32.mrb[0].mxu0
        %386 = vmatprep.mubr.f32.mxu0 0.0
        %387 = vmatmul.mubr.f32.gmra.mrb[0].mxu0 %v267
        %v388 = vpop.f32.mrb[0].mxu0
        %v389 = vadd.f32 0.0, %v388
        %v390 = vpop.f32.mrb[0].mxu0
        %391 = vmatprep.mubr.f32.mxu0 0.0
        %392 = vmatmul.mubr.f32.gmra.mrb[0].mxu0 %v270
        %v393 = vpop.f32.mrb[0].mxu0
        %v394 = vadd.f32 0.0, %v393
        %v395 = vpop.f32.mrb[0].mxu0
        %396 = vmatprep.mubr.f32.mxu0 0.0
        %397 = vmatmul.mubr.f32.gmra.mrb[0].mxu0 %v273
        %v398 = vpop.f32.mrb[0].mxu0
        %v399 = vadd.f32 0.0, %v398
        %v400 = vpop.f32.mrb[0].mxu0
        %401 = vmatprep.mubr.f32.mxu0 0.0
        %402 = vmatmul.mubr.f32.gmra.mrb[0].mxu0 %v276
        %v403 = vpop.f32.mrb[0].mxu0
        %v404 = vadd.f32 0.0, %v403
        %v405 = vpop.f32.mrb[0].mxu0
        %406 = vmatprep.mubr.f32.mxu0 0.0
        %407 = vmatmul.mubr.f32.gmra.mrb[0].mxu0 %v279
        %v408 = vpop.f32.mrb[0].mxu0
        %v409 = vadd.f32 0.0, %v408
        %v410 = vpop.f32.mrb[0].mxu0
        %411 = vmatprep.mubr.f32.mxu0 0.0
        %412 = vmatmul.mubr.f32.gmra.mrb[0].mxu0 %v282
        %v413 = vpop.f32.mrb[0].mxu0
        %v414 = vadd.f32 0.0, %v413
        %v415 = vpop.f32.mrb[0].mxu0
        %416 = vmatprep.mubr.f32.mxu0 0.0
        %417 = vmatmul.mubr.f32.gmra.mrb[0].mxu0 %v285
        %v418 = vpop.f32.mrb[0].mxu0
        %v419 = vadd.f32 0.0, %v418
        %v420 = vpop.f32.mrb[0].mxu0
        %421 = vmatprep.mubr.f32.mxu0 0.0
        %422 = vmatmul.mubr.f32.gmra.mrb[0].mxu0 %v288
        %v423 = vpop.f32.mrb[0].mxu0
        %v424 = vadd.f32 0.0, %v423
        %v425 = vpop.f32.mrb[0].mxu0
        %426 = vmatprep.mubr.f32.mxu0 0.0
        %427 = vmatmul.mubr.f32.gmra.mrb[0].mxu0 %v291
        %v428 = vpop.f32.mrb[0].mxu0
        %v429 = vadd.f32 0.0, %v428
        %v430 = vpop.f32.mrb[0].mxu0
        %431 = vmatprep.mubr.f32.mxu0 0.0
        %432 = vmatmul.mubr.f32.gmra.mrb[0].mxu0 %v294
        %v433 = vpop.f32.mrb[0].mxu0
        %v434 = vadd.f32 0.0, %v433
        %v435 = vpop.f32.mrb[0].mxu0
        %436 = vmatprep.mubr.f32.mxu0 0.0
        %437 = vmatmul.mubr.f32.gmra.mrb[0].mxu0 %v297
        %v438 = vpop.f32.mrb[0].mxu0
        %v439 = vadd.f32 0.0, %v438
        %v440 = vpop.f32.mrb[0].mxu0
        %441 = vmatprep.mubr.f32.mxu0 0.0
        %442 = vmatmul.mubr.f32.gmra.mrb[0].mxu0 %v300
        %v443 = vpop.f32.mrb[0].mxu0
        %v444 = vadd.f32 0.0, %v443
        %v445 = vpop.f32.mrb[0].mxu0
        %446 = vdwg.mxu0
        %vm447 = vcmask 261120
        %448 = vst.msk [vmem:[%s205] sm:$0xff] %vm447, %v369
        %449 = vst.msk [vmem:[%s205 + $0x8] sm:$0xff] %vm447, %v374
        %450 = vst.msk [vmem:[%s205 + $0x10] sm:$0xff] %vm447, %v379
        %451 = vst.msk [vmem:[%s205 + $0x18] sm:$0xff] %vm447, %v384
        %452 = vst.msk [vmem:[%s205 + $0x20] sm:$0xff] %vm447, %v389
        %453 = vst.msk [vmem:[%s205 + $0x28] sm:$0xff] %vm447, %v394
        %454 = vst.msk [vmem:[%s205 + $0x30] sm:$0xff] %vm447, %v399
        %455 = vst.msk [vmem:[%s205 + $0x38] sm:$0xff] %vm447, %v404
        %456 = vst.msk [vmem:[%s205 + $0x40] sm:$0xff] %vm447, %v409
        %457 = vst.msk [vmem:[%s205 + $0x48] sm:$0xff] %vm447, %v414
        %458 = vst.msk [vmem:[%s205 + $0x50] sm:$0xff] %vm447, %v419
        %459 = vst.msk [vmem:[%s205 + $0x58] sm:$0xff] %vm447, %v424
        %460 = vst.msk [vmem:[%s205 + $0x60] sm:$0xff] %vm447, %v429
        %461 = vst.msk [vmem:[%s205 + $0x68] sm:$0xff] %vm447, %v434
        %462 = vst.msk [vmem:[%s205 + $0x70] sm:$0xff] %vm447, %v439
        %463 = vst.msk [vmem:[%s205 + $0x78] sm:$0xff] %vm447, %v444
        %464 = vst.msk [vmem:[%s211] sm:$0xff] %vm447, %v434
        %465 = vst.msk [vmem:[%s211 + $0x8] sm:$0xff] %vm447, %v439
        %466 = vst.msk [vmem:[%s211 + $0x10] sm:$0xff] %vm447, %v444
        %p467 = scmp.eq.s32.totalorder %s17, 0
        // Predicated region
        $region29: #{tpu_custom_call.1} parent=27 // pred_check
          %p468 = pneg %p467
        $region30: #{tpu_custom_call.1} parent=27 // pred_check_branch
          %470 = sbr.rel (%p468) target = $region32
        $region31: #{tpu_custom_call.1} parent=27 // pred_region
          %vm471 = vcmask 254976
          %472 = vst.msk [vmem:[#allocation2] sm:$0x3] %vm471, 0.0
        $region32: #{tpu_custom_call.1} parent=27 // pred_fallthru
          _
        %v473 = vld [vmem:[#allocation2] sm:$0x3]
        %v474 = vsel %vm447, %v369, 0.0
        %v475 = vsel %vm447, %v374, 0.0
        %v476 = vadd.f32 %v474, %v475
        %v477 = vsel %vm447, %v379, 0.0
        %v478 = vadd.f32 %v476, %v477
        %v479 = vsel %vm447, %v384, 0.0
        %v480 = vadd.f32 %v478, %v479
        %v481 = vsel %vm447, %v389, 0.0
        %v482 = vadd.f32 %v480, %v481
        %v483 = vsel %vm447, %v394, 0.0
        %v484 = vadd.f32 %v482, %v483
        %v485 = vsel %vm447, %v399, 0.0
        %v486 = vadd.f32 %v484, %v485
        %v487 = vsel %vm447, %v404, 0.0
        %v488 = vadd.f32 %v486, %v487
        %v489 = vsel %vm447, %v409, 0.0
        %v490 = vadd.f32 %v488, %v489
        %v491 = vsel %vm447, %v414, 0.0
        %v492 = vadd.f32 %v490, %v491
        %v493 = vsel %vm447, %v419, 0.0
        %v494 = vadd.f32 %v492, %v493
        %v495 = vsel %vm447, %v424, 0.0
        %v496 = vadd.f32 %v494, %v495
        %v497 = vsel %vm447, %v429, 0.0
        %v498 = vadd.f32 %v496, %v497
        %v499 = vsel %vm447, %v434, 0.0
        %v500 = vadd.f32 %v498, %v499
        %v501 = vsel %vm447, %v439, 0.0
        %v502 = vadd.f32 %v500, %v501
        %v503 = vsel %vm447, %v444, 0.0
        %v504 = vadd.f32 %v502, %v503
        %v505 = vrot.slane %v504, 4
        %v506 = vadd.f32 %v504, %v505
        %v507 = vrot.slane %v506, 2
        %v508 = vadd.f32 %v506, %v507
        %v509 = vrot.slane %v508, 1
        %v510 = vadd.f32 %v508, %v509
        %v511 = vmul.f32 %v369, %v369
        %v512 = vmul.f32 %v374, %v374
        %v513 = vmul.f32 %v379, %v379
        %v514 = vmul.f32 %v384, %v384
        %v515 = vmul.f32 %v389, %v389
        %v516 = vmul.f32 %v394, %v394
        %v517 = vmul.f32 %v399, %v399
        %v518 = vmul.f32 %v404, %v404
        %v519 = vmul.f32 %v409, %v409
        %v520 = vmul.f32 %v414, %v414
        %v521 = vmul.f32 %v419, %v419
        %v522 = vmul.f32 %v424, %v424
        %v523 = vmul.f32 %v429, %v429
        %v524 = vmul.f32 %v434, %v434
        %v525 = vmul.f32 %v439, %v439
        %v526 = vmul.f32 %v444, %v444
        %v527 = vsel %vm447, %v511, 0.0
        %v528 = vsel %vm447, %v512, 0.0
        %v529 = vadd.f32 %v527, %v528
        %v530 = vsel %vm447, %v513, 0.0
        %v531 = vadd.f32 %v529, %v530
        %v532 = vsel %vm447, %v514, 0.0
        %v533 = vadd.f32 %v531, %v532
        %v534 = vsel %vm447, %v515, 0.0
        %v535 = vadd.f32 %v533, %v534
        %v536 = vsel %vm447, %v516, 0.0
        %v537 = vadd.f32 %v535, %v536
        %v538 = vsel %vm447, %v517, 0.0
        %v539 = vadd.f32 %v537, %v538
        %v540 = vsel %vm447, %v518, 0.0
        %v541 = vadd.f32 %v539, %v540
        %v542 = vsel %vm447, %v519, 0.0
        %v543 = vadd.f32 %v541, %v542
        %v544 = vsel %vm447, %v520, 0.0
        %v545 = vadd.f32 %v543, %v544
        %v546 = vsel %vm447, %v521, 0.0
        %v547 = vadd.f32 %v545, %v546
        %v548 = vsel %vm447, %v522, 0.0
        %v549 = vadd.f32 %v547, %v548
        %v550 = vsel %vm447, %v523, 0.0
        %v551 = vadd.f32 %v549, %v550
        %v552 = vsel %vm447, %v524, 0.0
        %v553 = vadd.f32 %v551, %v552
        %v554 = vsel %vm447, %v525, 0.0
        %v555 = vadd.f32 %v553, %v554
        %v556 = vsel %vm447, %v526, 0.0
        %v557 = vadd.f32 %v555, %v556
        %v558 = vrot.slane %v557, 4
        %v559 = vadd.f32 %v557, %v558
        %v560 = vrot.slane %v559, 2
        %v561 = vadd.f32 %v559, %v560
        %v562 = vrot.slane %v561, 1
        %v563 = vadd.f32 %v561, %v562
        %vm564 = vcmask 1040384
        %v565 = vsel %vm564, %v510, %v563
        %v566 = vadd.f32 %v473, %v565
        %vm567 = vcmask 254976
        %568 = vst.msk [vmem:[#allocation2] sm:$0x3] %vm567, %v566
        %s569 = smul.u32 16, %s17
        %p570 = scmp.lt.s32.totalorder %s569, 63
        %s571 = scalar_select %p570, %s569, 63
        %s572 = smul.addr %s571, 8
        %s573 = scalar_lea.vmem %s2, %s572
        %s574 = smul.u32 3, %s17
        %p575 = scmp.lt.s32.totalorder %s574, 11
        %s576 = scalar_select %p575, %s574, 11
        %s577 = smul.addr %s576, 8
        %s578 = scalar_lea.vmem %s3, %s577
        // Predicated region
        $region33: #{tpu_custom_call.1} parent=27 // pred_check
          %p579 = pneg %p82
        $region34: #{tpu_custom_call.1} parent=27 // pred_check_branch
          %581 = sbr.rel (%p579) target = $region36
        $region35: #{tpu_custom_call.1} parent=27 // pred_region
          %s582 = smul.u32 16, %s17
        $region36: #{tpu_custom_call.1} parent=27 // pred_fallthru
          _
        // Predicated region
        $region37: #{tpu_custom_call.1} parent=27 // pred_check
          %p583 = pneg %p108
        $region38: #{tpu_custom_call.1} parent=27 // pred_check_branch
          %585 = sbr.rel (%p583) target = $region40
        $region39: #{tpu_custom_call.1} parent=27 // pred_region
          %s586 = smul.u32 3, %s17
        $region40: #{tpu_custom_call.1} parent=27 // pred_fallthru
          _
        // Predicated region
        $region41: #{tpu_custom_call.1} parent=27 // pred_check
          %p587 = pneg %p129
        $region42: #{tpu_custom_call.1} parent=27 // pred_check_branch
          %589 = sbr.rel (%p587) target = $region44
        $region43: #{tpu_custom_call.1} parent=27 // pred_region
          %s591 = ssub.s32 32, 32
          %592 = vsyncadd [#allocation3], %s591
          %s594 = sshll.u32 [#allocation2], 4
          %s595 = int_to_ptr.vmem [resolvable:$true] %s594
          %597 = dma.vmem_to_hbm [thread:$0]  %s595, 32, %s4, [#allocation3]
        $region44: #{tpu_custom_call.1} parent=27 // pred_fallthru
          _
        // Predicated region
        $region45: #{tpu_custom_call.1} parent=27 // pred_check
          %p598 = pneg %p129
        $region46: #{tpu_custom_call.1} parent=27 // pred_check_branch
          %600 = sbr.rel (%p598) target = $region48
        $region47: #{tpu_custom_call.1} parent=27 // pred_region
          %601 = dma.done [#allocation3], 32
        $region48: #{tpu_custom_call.1} parent=27 // pred_fallthru
          _
      $region28: #{tpu_custom_call.1} parent=5 // pred_fallthru
        _
      %p602 = scmp.le.s32.totalorder 2, %s12
      // Predicated region
      $region49: #{tpu_custom_call.1} parent=5 // pred_check
        %p603 = pneg %p602
      $region50: #{tpu_custom_call.1} parent=5 // pred_check_branch
        %605 = sbr.rel (%p603) target = $region52
      $region51: #{tpu_custom_call.1} parent=5 // pred_region
        %s606 = ssub.s32 %s12, 2
        // Predicated region
        $region53: #{tpu_custom_call.1} parent=51 // pred_check
          %p607 = pneg %p88
        $region54: #{tpu_custom_call.1} parent=51 // pred_check_branch
          %609 = sbr.rel (%p607) target = $region56
        $region55: #{tpu_custom_call.1} parent=51 // pred_region
          %s610 = smul.u32 16, %s18
          %p611 = scmp.lt.s32.totalorder %s610, 63
          %s612 = scalar_select %p611, %s610, 63
          %s613 = smul.addr %s612, 8
          %s614 = scalar_lea.vmem %s2, %s613
        $region56: #{tpu_custom_call.1} parent=51 // pred_fallthru
          _
        // Predicated region
        $region57: #{tpu_custom_call.1} parent=51 // pred_check
          %p615 = pneg %p114
        $region58: #{tpu_custom_call.1} parent=51 // pred_check_branch
          %617 = sbr.rel (%p615) target = $region60
        $region59: #{tpu_custom_call.1} parent=51 // pred_region
          %s618 = smul.u32 3, %s18
          %p619 = scmp.lt.s32.totalorder %s618, 11
          %s620 = scalar_select %p619, %s618, 11
          %s621 = smul.addr %s620, 8
          %s622 = scalar_lea.vmem %s3, %s621
        $region60: #{tpu_custom_call.1} parent=51 // pred_fallthru
          _
      $region52: #{tpu_custom_call.1} parent=5 // pred_fallthru
        _
    $region6: #{tpu_custom_call.1} parent=1 // loop_footer
      %s16 = sadd.s32 1, %s12
    $region7: #{tpu_custom_call.1} parent=1 // loop_footer_branch
      %11 = sbr.rel target = $region3
    $region8: #{tpu_custom_call.1} parent=1 // loop_exit
      _
    %623 = vsyncpa [#allocation3], 1
    %s624 = scalar_lea.sflag [#allocation3], 1
    %625 = vsyncpa %s624, 1

</llo_original>
